<compile_context>
chip_gen: v7x
topology: tpu7x:2x2x1
jax: 0.10.0
libtpu: 0.0.40
codegen_flags: <defaults>
</compile_context>

<pallas_src>
import functools

import jax
import jax.numpy as jnp
from jax.experimental import pallas as pl
from jax.experimental.pallas import tpu as pltpu

_LANE = 128


def _round_up(n, m):
    return ((n + m - 1) // m) * m


def _leaky_relu(x, slope=0.01):
    return jnp.where(x > 0, x, slope * x)


def _vmem_capacity_bytes():
    """Physical VMEM per TensorCore (64 MiB v7x, 128 MiB v5e/v6e)."""
    try:
        return int(pltpu.get_tpu_info().vmem_capacity_bytes)
    except Exception:
        return 64 << 20  # conservative fallback: v7x per-TC VMEM


def visual_encoder_kernel(x_ref, w1_ref, b1_ref, w2_ref, b2_ref, w3_ref, b3_ref,
                          o_ref, *, approx_norm):
    # Per-tile cast to the MXU input dtype (cheap VPU op hidden under the MXU);
    # avoids a separate wrapper-side HBM cast pass over x.
    x = x_ref[...].astype(w1_ref.dtype)

    # fc1 + leaky_relu (MXU accumulates in f32; elementwise stays f32 on VPU)
    h = jnp.dot(x, w1_ref[...], preferred_element_type=jnp.float32) + b1_ref[...]
    h = _leaky_relu(h)

    # dropout(p=0.2) -> identity in eval mode.

    # fc2 + leaky_relu
    h = jnp.dot(h.astype(w2_ref.dtype), w2_ref[...],
                preferred_element_type=jnp.float32) + b2_ref[...]
    h = _leaky_relu(h)

    # fc3 + leaky_relu
    h = jnp.dot(h.astype(w3_ref.dtype), w3_ref[...],
                preferred_element_type=jnp.float32) + b3_ref[...]
    h = _leaky_relu(h)

    # l2norm along the (padded) feature axis; padded columns are exactly 0 so
    # the sum of squares matches the unpadded reference.  Note: when
    # B % block_rows != 0 the last tile computes on garbage rows -- safe here
    # because every op is strictly row-wise and OOB rows are never returned.
    sumsq = jnp.sum(h * h, axis=1, keepdims=True)
    denom = jnp.sqrt(sumsq) + 1e-8
    if approx_norm:
        h = h * pl.reciprocal(denom, approx=True)   # EUP slot, off the VALU
    else:
        h = h / denom                               # exact path (f32 validation)
    o_ref[...] = h.astype(o_ref.dtype)


@functools.partial(jax.jit, static_argnames=("out_dim", "block_rows", "approx_norm"))
def visual_encoder(x, params, *, out_dim, block_rows=None, approx_norm=True):
    """x: [B, visual_dim]. params: lane-padded weights from prepare_params()."""
    w1, b1 = params["w1"], params["b1"]
    w2, b2 = params["w2"], params["b2"]
    w3, b3 = params["w3"], params["b3"]

    B, D = x.shape
    Dp = w1.shape[0]   # padded visual_dim (multiple of 128)
    Hp = w2.shape[1]   # padded hidden
    Fp = w3.shape[1]   # padded factor

    cap = _vmem_capacity_bytes()

    if block_rows is None:
        if B <= 128:
            block_rows = _round_up(B, 8)          # tiny batch: one lean step
        else:
            # Fill the 256-row MXU on v6e/v7x (512 when the big-VMEM parts have
            # room), but cap at ceil(B/2) so there are always >= 2 grid steps
            # and v7x's two TensorCores both get work via the 'parallel' axis.
            half = _round_up(pl.cdiv(B, 2), 8)
            target = 512 if (cap >= (100 << 20) and B >= 1024) else 256
            block_rows = min(target, half)

    # Pad the input feature axis only if visual_dim is not already lane-aligned
    # (no dtype cast here -- the kernel casts per tile).
    x_p = x if Dp == D else jnp.pad(x, ((0, 0), (0, Dp - D)))

    grid = (pl.cdiv(B, block_rows),)

    # Weights/biases are fully resident with a constant block index; single
    # buffering (Buffered(1)) since there is never a refetch DMA to hide.
    full = lambda a: pl.BlockSpec(a.shape, lambda i: (0,) * a.ndim,
                                  pipeline_mode=pl.Buffered(1))

    itemsize = lambda a: jnp.dtype(a.dtype).itemsize
    param_bytes = sum(a.size * itemsize(a) for a in (w1, b1, w2, b2, w3, b3))
    out_bytes = B * Fp * itemsize(x)

    # Generation-aware VMEM budget: at least half of physical (32 MiB v7x,
    # 64 MiB v5e/v6e), raised toward 3/4 of physical only if the resident
    # weights plus double-buffered activation tiles actually need it.
    act_bytes = 2 * block_rows * (Dp + Fp) * itemsize(x)
    needed = param_bytes + act_bytes + (4 << 20)
    vmem_limit = int(max(cap // 2, min(needed, (cap * 3) // 4)))

    cost = pl.CostEstimate(
        flops=int(2 * B * (Dp * Dp + Dp * Hp + Hp * Fp)),
        transcendentals=int(2 * B),  # sqrt + reciprocal per row
        bytes_accessed=int(x_p.size * itemsize(x_p) + out_bytes + param_bytes),
    )

    out_p = pl.pallas_call(
        functools.partial(visual_encoder_kernel, approx_norm=approx_norm),
        # Output directly in the caller's dtype: no post-call cast pass and
        # half the HBM writeback vs always-f32.
        out_shape=jax.ShapeDtypeStruct((B, Fp), x.dtype),
        grid_spec=pltpu.PrefetchScalarGridSpec(
            num_scalar_prefetch=0,
            grid=grid,
            in_specs=[
                pl.BlockSpec((block_rows, Dp), lambda i: (i, 0)),
                full(w1), full(b1), full(w2), full(b2), full(w3), full(b3),
            ],
            out_specs=pl.BlockSpec((block_rows, Fp), lambda i: (i, 0)),
        ),
        compiler_params=pltpu.CompilerParams(
            dimension_semantics=("parallel",),
            vmem_limit_bytes=vmem_limit,
        ),
        cost_estimate=cost,
    )(x_p, w1, b1, w2, b2, w3, b3)

    # Slice back to the real (unpadded) output width.
    return out_p[:, :out_dim]


def init_params(key, visual_dim, factor):
    """nn.Linear-shaped params, stored transposed as (in, out) with (1, out) bias."""
    hidden = (visual_dim + factor) // 2
    ks = jax.random.split(key, 6)

    def lin(kw, kb, fan_in, fan_out):
        bound = 1.0 / jnp.sqrt(fan_in)
        w = jax.random.uniform(kw, (fan_in, fan_out), jnp.float32, -bound, bound)
        b = jax.random.uniform(kb, (1, fan_out), jnp.float32, -bound, bound)
        return w, b

    w1, b1 = lin(ks[0], ks[1], visual_dim, visual_dim)
    w2, b2 = lin(ks[2], ks[3], visual_dim, hidden)
    w3, b3 = lin(ks[4], ks[5], hidden, factor)
    return dict(w1=w1, b1=b1, w2=w2, b2=b2, w3=w3, b3=b3)


def prepare_params(params, matmul_dtype=jnp.bfloat16):
    """Zero-pad every feature dim to a multiple of 128 (lane-dense) and cast
    weights to the MXU input dtype.  Biases stay f32 (added in f32 on the VPU)."""
    def pad_w(w):
        i, o = w.shape
        w = jnp.pad(w, ((0, _round_up(i, _LANE) - i), (0, _round_up(o, _LANE) - o)))
        return w.astype(matmul_dtype)

    def pad_b(b):
        o = b.shape[1]
        return jnp.pad(b, ((0, 0), (0, _round_up(o, _LANE) - o))).astype(jnp.float32)

    return dict(
        w1=pad_w(params["w1"]), b1=pad_b(params["b1"]),
        w2=pad_w(params["w2"]), b2=pad_b(params["b2"]),
        w3=pad_w(params["w3"]), b3=pad_b(params["b3"]),
    )


def visual_encoder_ref(x, p):
    """Pure-JAX f32 reference for correctness checking."""
    h = _leaky_relu(x @ p["w1"] + p["b1"])
    h = _leaky_relu(h @ p["w2"] + p["b2"])
    h = _leaky_relu(h @ p["w3"] + p["b3"])
    norm = jnp.sqrt(jnp.sum(h * h, axis=1, keepdims=True)) + 1e-8
    return h / norm


if __name__ == "__main__":
    key = jax.random.PRNGKey(0)
    k_x, k_p = jax.random.split(key)

    batch, visual_dim, factor = 8, 32, 16   # hidden = (32 + 16)//2 = 24
    x = jax.random.normal(k_x, (batch, visual_dim), jnp.float32)
    params = init_params(k_p, visual_dim, factor)
    ref = visual_encoder_ref(x, params)

    # f32 matmul path with exact l2norm: tight check against the reference.
    out_f32 = visual_encoder(x, prepare_params(params, jnp.float32),
                             out_dim=factor, approx_norm=False)
    out_f32 = jax.block_until_ready(out_f32)
    assert out_f32.shape == (batch, factor), out_f32.shape
    assert jnp.allclose(out_f32, ref, atol=5e-3, rtol=5e-3), "f32 mismatch vs reference"

    # bf16 matmul path (default perf configuration): looser tolerance.
    out_bf16 = visual_encoder(x, prepare_params(params), out_dim=factor)
    out_bf16 = jax.block_until_ready(out_bf16)
    assert out_bf16.shape == (batch, factor), out_bf16.shape
    assert jnp.allclose(out_bf16, ref, atol=3e-2, rtol=3e-2), "bf16 mismatch vs reference"

    print("KERNEL_OK")
</pallas_src>

<mosaic_0001>
module attributes {stable_mosaic.version = 11 : i64} {
  func.func @visual_encoder_kernel(%arg0: i32, %arg1: memref<8x128xf32, #tpu.memory_space<vmem>>, %arg2: memref<128x128xf32, #tpu.memory_space<vmem>>, %arg3: memref<1x128xf32, #tpu.memory_space<vmem>>, %arg4: memref<128x128xf32, #tpu.memory_space<vmem>>, %arg5: memref<1x128xf32, #tpu.memory_space<vmem>>, %arg6: memref<128x128xf32, #tpu.memory_space<vmem>>, %arg7: memref<1x128xf32, #tpu.memory_space<vmem>>, %arg8: memref<8x128xf32, #tpu.memory_space<vmem>>) attributes {dimension_semantics = [#tpu.dimension_semantics<parallel>], iteration_bounds = array<i64: 1>, scalar_prefetch = 0 : i64, scratch_operands = 0 : i64, tpu.core_type = #tpu.core_type<tc>, window_params = [{transform_indices = @transform_0, window_bounds = array<i64: 8, 128>}, {pipeline_mode = #tpu.pipeline_mode<synchronous>, transform_indices = @transform_1, window_bounds = array<i64: 128, 128>}, {pipeline_mode = #tpu.pipeline_mode<synchronous>, transform_indices = @transform_2, window_bounds = array<i64: 1, 128>}, {pipeline_mode = #tpu.pipeline_mode<synchronous>, transform_indices = @transform_3, window_bounds = array<i64: 128, 128>}, {pipeline_mode = #tpu.pipeline_mode<synchronous>, transform_indices = @transform_4, window_bounds = array<i64: 1, 128>}, {pipeline_mode = #tpu.pipeline_mode<synchronous>, transform_indices = @transform_5, window_bounds = array<i64: 128, 128>}, {pipeline_mode = #tpu.pipeline_mode<synchronous>, transform_indices = @transform_6, window_bounds = array<i64: 1, 128>}, {transform_indices = @transform_7, window_bounds = array<i64: 8, 128>}]} {
    %c0 = arith.constant 0 : index
    %c0_0 = arith.constant 0 : index
    %0 = vector.load %arg1[%c0, %c0_0] : memref<8x128xf32, #tpu.memory_space<vmem>>, vector<8x128xf32>
    %c0_1 = arith.constant 0 : index
    %c0_2 = arith.constant 0 : index
    %1 = vector.load %arg2[%c0_1, %c0_2] : memref<128x128xf32, #tpu.memory_space<vmem>>, vector<128x128xf32>
    %cst = arith.constant dense<0.000000e+00> : vector<8x128xf32>
    %2 = tpu.matmul %0, %1, %cst {dimension_numbers = #tpu.dot_dimension_numbers<[1], [0], [0], [1], [0, 0, 1, 1], [], []>} : vector<8x128xf32>, vector<128x128xf32>, vector<8x128xf32> -> vector<8x128xf32>
    %c0_3 = arith.constant 0 : index
    %c0_4 = arith.constant 0 : index
    %3 = vector.load %arg3[%c0_3, %c0_4] : memref<1x128xf32, #tpu.memory_space<vmem>>, vector<1x128xf32>
    %4 = vector.broadcast %3 : vector<1x128xf32> to vector<8x128xf32>
    %5 = arith.addf %2, %4 : vector<8x128xf32>
    %cst_5 = arith.constant 0.000000e+00 : f32
    %6 = vector.broadcast %cst_5 : f32 to vector<8x128xf32>
    %7 = arith.cmpf ogt, %5, %6 : vector<8x128xf32>
    %cst_6 = arith.constant 0.00999999977 : f32
    %8 = vector.broadcast %cst_6 : f32 to vector<8x128xf32>
    %9 = arith.mulf %8, %5 : vector<8x128xf32>
    %10 = arith.select %7, %5, %9 : vector<8x128xi1>, vector<8x128xf32>
    %c0_7 = arith.constant 0 : index
    %c0_8 = arith.constant 0 : index
    %11 = vector.load %arg4[%c0_7, %c0_8] : memref<128x128xf32, #tpu.memory_space<vmem>>, vector<128x128xf32>
    %cst_9 = arith.constant dense<0.000000e+00> : vector<8x128xf32>
    %12 = tpu.matmul %10, %11, %cst_9 {dimension_numbers = #tpu.dot_dimension_numbers<[1], [0], [0], [1], [0, 0, 1, 1], [], []>} : vector<8x128xf32>, vector<128x128xf32>, vector<8x128xf32> -> vector<8x128xf32>
    %c0_10 = arith.constant 0 : index
    %c0_11 = arith.constant 0 : index
    %13 = vector.load %arg5[%c0_10, %c0_11] : memref<1x128xf32, #tpu.memory_space<vmem>>, vector<1x128xf32>
    %14 = vector.broadcast %13 : vector<1x128xf32> to vector<8x128xf32>
    %15 = arith.addf %12, %14 : vector<8x128xf32>
    %cst_12 = arith.constant 0.000000e+00 : f32
    %16 = vector.broadcast %cst_12 : f32 to vector<8x128xf32>
    %17 = arith.cmpf ogt, %15, %16 : vector<8x128xf32>
    %cst_13 = arith.constant 0.00999999977 : f32
    %18 = vector.broadcast %cst_13 : f32 to vector<8x128xf32>
    %19 = arith.mulf %18, %15 : vector<8x128xf32>
    %20 = arith.select %17, %15, %19 : vector<8x128xi1>, vector<8x128xf32>
    %c0_14 = arith.constant 0 : index
    %c0_15 = arith.constant 0 : index
    %21 = vector.load %arg6[%c0_14, %c0_15] : memref<128x128xf32, #tpu.memory_space<vmem>>, vector<128x128xf32>
    %cst_16 = arith.constant dense<0.000000e+00> : vector<8x128xf32>
    %22 = tpu.matmul %20, %21, %cst_16 {dimension_numbers = #tpu.dot_dimension_numbers<[1], [0], [0], [1], [0, 0, 1, 1], [], []>} : vector<8x128xf32>, vector<128x128xf32>, vector<8x128xf32> -> vector<8x128xf32>
    %c0_17 = arith.constant 0 : index
    %c0_18 = arith.constant 0 : index
    %23 = vector.load %arg7[%c0_17, %c0_18] : memref<1x128xf32, #tpu.memory_space<vmem>>, vector<1x128xf32>
    %24 = vector.broadcast %23 : vector<1x128xf32> to vector<8x128xf32>
    %25 = arith.addf %22, %24 : vector<8x128xf32>
    %cst_19 = arith.constant 0.000000e+00 : f32
    %26 = vector.broadcast %cst_19 : f32 to vector<8x128xf32>
    %27 = arith.cmpf ogt, %25, %26 : vector<8x128xf32>
    %cst_20 = arith.constant 0.00999999977 : f32
    %28 = vector.broadcast %cst_20 : f32 to vector<8x128xf32>
    %29 = arith.mulf %28, %25 : vector<8x128xf32>
    %30 = arith.select %27, %25, %29 : vector<8x128xi1>, vector<8x128xf32>
    %31 = arith.mulf %30, %30 : vector<8x128xf32>
    %cst_21 = arith.constant dense<0.000000e+00> : vector<8xf32>
    %32 = vector.multi_reduction <add>, %31, %cst_21 [1] : vector<8x128xf32> to vector<8xf32>
    %33 = vector.shape_cast %32 : vector<8xf32> to vector<8x1xf32>
    %34 = math.sqrt %33 : vector<8x1xf32>
    %cst_22 = arith.constant 9.99999993E-9 : f32
    %35 = vector.broadcast %cst_22 : f32 to vector<8x1xf32>
    %36 = arith.addf %34, %35 : vector<8x1xf32>
    %37 = vector.broadcast %36 : vector<8x1xf32> to vector<8x128xf32>
    %38 = arith.divf %30, %37 : vector<8x128xf32>
    %c0_23 = arith.constant 0 : index
    %c0_24 = arith.constant 0 : index
    %39 = vector.load %arg8[%c0_23, %c0_24] : memref<8x128xf32, #tpu.memory_space<vmem>>, vector<8x128xf32>
    tpu.vector_store %arg8[%c0_23, %c0_24], %38 {strides = array<i32>} : memref<8x128xf32, #tpu.memory_space<vmem>>, vector<8x128xf32>,
    return
  }
  func.func @transform_0(%arg0: i32) -> (i32, i32) {
    %c0_i32 = arith.constant 0 : i32
    %c0_i32_0 = arith.constant 0 : i32
    return %arg0, %c0_i32 : i32, i32
  }
  func.func @transform_1(%arg0: i32) -> (i32, i32) {
    %c0_i32 = arith.constant 0 : i32
    %c0_i32_0 = arith.constant 0 : i32
    %c0_i32_1 = arith.constant 0 : i32
    return %c0_i32, %c0_i32_0 : i32, i32
  }
  func.func @transform_2(%arg0: i32) -> (i32, i32) {
    %c0_i32 = arith.constant 0 : i32
    %c0_i32_0 = arith.constant 0 : i32
    %c0_i32_1 = arith.constant 0 : i32
    return %c0_i32, %c0_i32_0 : i32, i32
  }
  func.func @transform_3(%arg0: i32) -> (i32, i32) {
    %c0_i32 = arith.constant 0 : i32
    %c0_i32_0 = arith.constant 0 : i32
    %c0_i32_1 = arith.constant 0 : i32
    return %c0_i32, %c0_i32_0 : i32, i32
  }
  func.func @transform_4(%arg0: i32) -> (i32, i32) {
    %c0_i32 = arith.constant 0 : i32
    %c0_i32_0 = arith.constant 0 : i32
    %c0_i32_1 = arith.constant 0 : i32
    return %c0_i32, %c0_i32_0 : i32, i32
  }
  func.func @transform_5(%arg0: i32) -> (i32, i32) {
    %c0_i32 = arith.constant 0 : i32
    %c0_i32_0 = arith.constant 0 : i32
    %c0_i32_1 = arith.constant 0 : i32
    return %c0_i32, %c0_i32_0 : i32, i32
  }
  func.func @transform_6(%arg0: i32) -> (i32, i32) {
    %c0_i32 = arith.constant 0 : i32
    %c0_i32_0 = arith.constant 0 : i32
    %c0_i32_1 = arith.constant 0 : i32
    return %c0_i32, %c0_i32_0 : i32, i32
  }
  func.func @transform_7(%arg0: i32) -> (i32, i32) {
    %c0_i32 = arith.constant 0 : i32
    %c0_i32_0 = arith.constant 0 : i32
    return %arg0, %c0_i32 : i32, i32
  }
}

</mosaic_0001>

<llo_original>
// kernel: visual_encoder.1
$region0: #{visual_encoder.1}
  #allocation0 [shape = 'u32[]', space=smem, size = 0x4, offset = 0x4, fixed_abs, tag = 'smem constant byte address 0x4 - core index']
  #allocation1 [shape = 'u32[144,128]{1,0:T(1,128)}', space=vmem, size = 0x12000, scoped, tag = 'internal scratch']
  %s0 = inlined_call_operand.vmem [shape: f32[8,128], index: 0, kind: input, shape index: {}]
  %s1 = inlined_call_operand.hbm [shape: f32[128,128], index: 1, kind: input, shape index: {}]
  %s2 = inlined_call_operand.vmem [shape: f32[1,128], index: 2, kind: input, shape index: {}]
  %s3 = inlined_call_operand.hbm [shape: f32[128,128], index: 3, kind: input, shape index: {}]
  %s4 = inlined_call_operand.vmem [shape: f32[1,128], index: 4, kind: input, shape index: {}]
  %s5 = inlined_call_operand.hbm [shape: f32[128,128], index: 5, kind: input, shape index: {}]
  %s6 = inlined_call_operand.vmem [shape: f32[1,128], index: 6, kind: input, shape index: {}]
  %s7 = inlined_call_operand.hbm [shape: f32[8,128], index: 7, kind: output, shape index: {}]
  %s8 = sld [smem:[#allocation0]]
  $region50: #{visual_encoder.1} parent=0
    _
  %s10 = ssub.s32 1, %s8
  %s11 = scalar_select 0, %s10, %s8
  $region1: #{visual_encoder.1} parent=0
    #allocation2 [shape = 'u8[65536]{0}', space=vmem, size = 0x10000, scoped, tag = 'input window, operand 1, single buffered']
    #allocation3 [shape = 's32[1]{0}', space=sflag, size = 0x4, scoped, tag = 'scoped memory for visual_encoder.1']
    #allocation4 [shape = 's32[1]{0}', space=sflag, size = 0x4, scoped, tag = 'scoped memory for visual_encoder.1']
    #allocation5 [shape = 'u8[65536]{0}', space=vmem, size = 0x10000, scoped, tag = 'input window, operand 3, single buffered']
    #allocation6 [shape = 's32[1]{0}', space=sflag, size = 0x4, scoped, tag = 'scoped memory for visual_encoder.1']
    #allocation7 [shape = 'u8[65536]{0}', space=vmem, size = 0x10000, scoped, tag = 'input window, operand 5, single buffered']
    #allocation8 [shape = 'u8[4096]{0}', space=vmem, size = 0x1000, scoped, tag = 'output window, operand 0, single buffered']
    %12 = vsyncpa [#allocation3], 0
    %13 = vsyncpa [#allocation6], 0
    %14 = vsyncpa [#allocation4], 0
    // Predicated region
    $region2: #{visual_encoder.1} parent=1 // pred_check
      _
    $region3: #{visual_encoder.1} parent=1 // pred_check_branch
      %16 = sbr.rel (0) target = $region5
    $region4: #{visual_encoder.1} parent=1 // pred_region
      _
    $region5: #{visual_encoder.1} parent=1 // pred_fallthru
      _
    // Predicated region
    $region6: #{visual_encoder.1} parent=1 // pred_check
      _
    $region7: #{visual_encoder.1} parent=1 // pred_check_branch
      %18 = sbr.rel (0) target = $region9
    $region8: #{visual_encoder.1} parent=1 // pred_region
      %s20 = ssub.s32 2048, 2048
      %21 = vsyncadd [#allocation3], %s20
      %s22 = sshll.u32 [#allocation2], 4
      %s23 = int_to_ptr.vmem [resolvable:$true] %s22
      %28 = dma.hbm_to_vmem [thread:$0]  %s1, 2048, %s23, [#allocation3], 128, 128, 8
    $region9: #{visual_encoder.1} parent=1 // pred_fallthru
      _
    // Predicated region
    $region10: #{visual_encoder.1} parent=1 // pred_check
      _
    $region11: #{visual_encoder.1} parent=1 // pred_check_branch
      %30 = sbr.rel (0) target = $region13
    $region12: #{visual_encoder.1} parent=1 // pred_region
      _
    $region13: #{visual_encoder.1} parent=1 // pred_fallthru
      _
    // Predicated region
    $region14: #{visual_encoder.1} parent=1 // pred_check
      _
    $region15: #{visual_encoder.1} parent=1 // pred_check_branch
      %32 = sbr.rel (0) target = $region17
    $region16: #{visual_encoder.1} parent=1 // pred_region
      %s34 = ssub.s32 2048, 2048
      %35 = vsyncadd [#allocation6], %s34
      %s36 = sshll.u32 [#allocation5], 4
      %s37 = int_to_ptr.vmem [resolvable:$true] %s36
      %42 = dma.hbm_to_vmem [thread:$0]  %s3, 2048, %s37, [#allocation6], 128, 128, 8
    $region17: #{visual_encoder.1} parent=1 // pred_fallthru
      _
    // Predicated region
    $region18: #{visual_encoder.1} parent=1 // pred_check
      _
    $region19: #{visual_encoder.1} parent=1 // pred_check_branch
      %44 = sbr.rel (0) target = $region21
    $region20: #{visual_encoder.1} parent=1 // pred_region
      _
    $region21: #{visual_encoder.1} parent=1 // pred_fallthru
      _
    // Predicated region
    $region22: #{visual_encoder.1} parent=1 // pred_check
      _
    $region23: #{visual_encoder.1} parent=1 // pred_check_branch
      %46 = sbr.rel (0) target = $region25
    $region24: #{visual_encoder.1} parent=1 // pred_region
      %s48 = ssub.s32 2048, 2048
      %49 = vsyncadd [#allocation6], %s48
      %s50 = sshll.u32 [#allocation7], 4
      %s51 = int_to_ptr.vmem [resolvable:$true] %s50
      %56 = dma.hbm_to_vmem [thread:$0]  %s5, 2048, %s51, [#allocation6], 128, 128, 8
    $region25: #{visual_encoder.1} parent=1 // pred_fallthru
      _
    // Predicated region
    $region26: #{visual_encoder.1} parent=1 // pred_check
      _
    $region27: #{visual_encoder.1} parent=1 // pred_check_branch
      %58 = sbr.rel (0) target = $region29
    $region28: #{visual_encoder.1} parent=1 // pred_region
      _
    $region29: #{visual_encoder.1} parent=1 // pred_fallthru
      _
    // Predicated region
    $region30: #{visual_encoder.1} parent=1 // pred_check
      _
    $region31: #{visual_encoder.1} parent=1 // pred_check_branch
      %60 = sbr.rel (0) target = $region33
    $region32: #{visual_encoder.1} parent=1 // pred_region
      %61 = dma.done [#allocation3], 2048
    $region33: #{visual_encoder.1} parent=1 // pred_fallthru
      _
    // Predicated region
    $region34: #{visual_encoder.1} parent=1 // pred_check
      _
    $region35: #{visual_encoder.1} parent=1 // pred_check_branch
      %63 = sbr.rel (0) target = $region37
    $region36: #{visual_encoder.1} parent=1 // pred_region
      %64 = dma.done [#allocation6], 2048
    $region37: #{visual_encoder.1} parent=1 // pred_fallthru
      _
    // Predicated region
    $region38: #{visual_encoder.1} parent=1 // pred_check
      _
    $region39: #{visual_encoder.1} parent=1 // pred_check_branch
      %66 = sbr.rel (0) target = $region41
    $region40: #{visual_encoder.1} parent=1 // pred_region
      %67 = dma.done [#allocation6], 2048
    $region41: #{visual_encoder.1} parent=1 // pred_fallthru
      _
    %v68 = vld [vmem:[%s0] sm:$0xff]
    %v69 = vld [vmem:[#allocation2] sm:$0xff]
    %v70 = vld [vmem:[#allocation2 + $0x8] sm:$0xff]
    %v71 = vld [vmem:[#allocation2 + $0x10] sm:$0xff]
    %v72 = vld [vmem:[#allocation2 + $0x18] sm:$0xff]
    %v73 = vld [vmem:[#allocation2 + $0x20] sm:$0xff]
    %v74 = vld [vmem:[#allocation2 + $0x28] sm:$0xff]
    %v75 = vld [vmem:[#allocation2 + $0x30] sm:$0xff]
    %v76 = vld [vmem:[#allocation2 + $0x38] sm:$0xff]
    %v77 = vld [vmem:[#allocation2 + $0x40] sm:$0xff]
    %v78 = vld [vmem:[#allocation2 + $0x48] sm:$0xff]
    %v79 = vld [vmem:[#allocation2 + $0x50] sm:$0xff]
    %v80 = vld [vmem:[#allocation2 + $0x58] sm:$0xff]
    %v81 = vld [vmem:[#allocation2 + $0x60] sm:$0xff]
    %v82 = vld [vmem:[#allocation2 + $0x68] sm:$0xff]
    %v83 = vld [vmem:[#allocation2 + $0x70] sm:$0xff]
    %v84 = vld [vmem:[#allocation2 + $0x78] sm:$0xff]
    %v85 = vld [vmem:[%s2] sm:$0x1]
    %v87 = vlaneseq
    %v88 = vshrl.u32 %v87, 7
    %v89 = vsub.s32 0, %v88
    %v90 = vrot.slane %v85, %v89
    %92 = vmatprep.subr.mxu0 0.0
    %93 = vmatpush1.msra.mxu0 %v69
    %94 = vmatprep.subr.mxu0 0.0
    %95 = vmatpush1.msra.mxu0 %v70
    %96 = vmatprep.subr.mxu0 0.0
    %97 = vmatpush1.msra.mxu0 %v71
    %98 = vmatprep.subr.mxu0 0.0
    %99 = vmatpush1.msra.mxu0 %v72
    %100 = vmatprep.subr.mxu0 0.0
    %101 = vmatpush1.msra.mxu0 %v73
    %102 = vmatprep.subr.mxu0 0.0
    %103 = vmatpush1.msra.mxu0 %v74
    %104 = vmatprep.subr.mxu0 0.0
    %105 = vmatpush1.msra.mxu0 %v75
    %106 = vmatprep.subr.mxu0 0.0
    %107 = vmatpush1.msra.mxu0 %v76
    %108 = vmatprep.subr.mxu0 0.0
    %109 = vmatpush1.msra.mxu0 %v77
    %110 = vmatprep.subr.mxu0 0.0
    %111 = vmatpush1.msra.mxu0 %v78
    %112 = vmatprep.subr.mxu0 0.0
    %113 = vmatpush1.msra.mxu0 %v79
    %114 = vmatprep.subr.mxu0 0.0
    %115 = vmatpush1.msra.mxu0 %v80
    %116 = vmatprep.subr.mxu0 0.0
    %117 = vmatpush1.msra.mxu0 %v81
    %118 = vmatprep.subr.mxu0 0.0
    %119 = vmatpush1.msra.mxu0 %v82
    %120 = vmatprep.subr.mxu0 0.0
    %121 = vmatpush1.msra.mxu0 %v83
    %122 = vmatprep.subr.mxu0 0.0
    %123 = vmatpush1.msra.mxu0 %v84
    %124 = vmatprep.subr.mxu0 0.0
    %125 = vmatpush1.msra.mxu0 0.0
    %126 = vmatprep.subr.mxu0 0.0
    %127 = vmatpush1.msra.mxu0 0.0
    %128 = vmatprep.subr.mxu0 0.0
    %129 = vmatpush1.msra.mxu0 0.0
    %130 = vmatprep.subr.mxu0 0.0
    %131 = vmatpush1.msra.mxu0 0.0
    %132 = vmatprep.subr.mxu0 0.0
    %133 = vmatpush1.msra.mxu0 0.0
    %134 = vmatprep.subr.mxu0 0.0
    %135 = vmatpush1.msra.mxu0 0.0
    %136 = vmatprep.subr.mxu0 0.0
    %137 = vmatpush1.msra.mxu0 0.0
    %138 = vmatprep.subr.mxu0 0.0
    %139 = vmatpush1.msra.mxu0 0.0
    %140 = vmatprep.subr.mxu0 0.0
    %141 = vmatpush1.msra.mxu0 0.0
    %142 = vmatprep.subr.mxu0 0.0
    %143 = vmatpush1.msra.mxu0 0.0
    %144 = vmatprep.subr.mxu0 0.0
    %145 = vmatpush1.msra.mxu0 0.0
    %146 = vmatprep.subr.mxu0 0.0
    %147 = vmatpush1.msra.mxu0 0.0
    %148 = vmatprep.subr.mxu0 0.0
    %149 = vmatpush1.msra.mxu0 0.0
    %150 = vmatprep.subr.mxu0 0.0
    %151 = vmatpush1.msra.mxu0 0.0
    %152 = vmatprep.subr.mxu0 0.0
    %153 = vmatpush1.msra.mxu0 0.0
    %154 = vmatprep.subr.mxu0 0.0
    %155 = vmatpush1.msra.mxu0 0.0
    %156 = vmatprep.mubr.f32.mxu0 0.0
    %157 = vmatmul.mubr.f32.gmra.mrb[0].mxu0 %v68
    %v158 = vpop.f32.mrb[0].mxu0
    %v159 = vadd.f32 %v90, %v158
    %v160 = vpop.f32.mrb[0].mxu0
    %161 = vdwg.mxu0
    %vm162 = vcmp.gt.f32.partialorder %v159, 0.0
    %v163 = vmul.f32 %v159, 0.01
    %v164 = vsel %vm162, %v159, %v163
    %v165 = vld [vmem:[#allocation5] sm:$0xff]
    %v166 = vld [vmem:[#allocation5 + $0x8] sm:$0xff]
    %v167 = vld [vmem:[#allocation5 + $0x10] sm:$0xff]
    %v168 = vld [vmem:[#allocation5 + $0x18] sm:$0xff]
    %v169 = vld [vmem:[#allocation5 + $0x20] sm:$0xff]
    %v170 = vld [vmem:[#allocation5 + $0x28] sm:$0xff]
    %v171 = vld [vmem:[#allocation5 + $0x30] sm:$0xff]
    %v172 = vld [vmem:[#allocation5 + $0x38] sm:$0xff]
    %v173 = vld [vmem:[#allocation5 + $0x40] sm:$0xff]
    %v174 = vld [vmem:[#allocation5 + $0x48] sm:$0xff]
    %v175 = vld [vmem:[#allocation5 + $0x50] sm:$0xff]
    %v176 = vld [vmem:[#allocation5 + $0x58] sm:$0xff]
    %v177 = vld [vmem:[#allocation5 + $0x60] sm:$0xff]
    %v178 = vld [vmem:[#allocation5 + $0x68] sm:$0xff]
    %v179 = vld [vmem:[#allocation5 + $0x70] sm:$0xff]
    %v180 = vld [vmem:[#allocation5 + $0x78] sm:$0xff]
    %v181 = vld [vmem:[%s4] sm:$0x1]
    %v183 = vlaneseq
    %v184 = vshrl.u32 %v183, 7
    %v185 = vsub.s32 0, %v184
    %v186 = vrot.slane %v181, %v185
    %188 = vmatprep.subr.mxu0 0.0
    %189 = vmatpush1.msra.mxu0 %v165
    %190 = vmatprep.subr.mxu0 0.0
    %191 = vmatpush1.msra.mxu0 %v166
    %192 = vmatprep.subr.mxu0 0.0
    %193 = vmatpush1.msra.mxu0 %v167
    %194 = vmatprep.subr.mxu0 0.0
    %195 = vmatpush1.msra.mxu0 %v168
    %196 = vmatprep.subr.mxu0 0.0
    %197 = vmatpush1.msra.mxu0 %v169
    %198 = vmatprep.subr.mxu0 0.0
    %199 = vmatpush1.msra.mxu0 %v170
    %200 = vmatprep.subr.mxu0 0.0
    %201 = vmatpush1.msra.mxu0 %v171
    %202 = vmatprep.subr.mxu0 0.0
    %203 = vmatpush1.msra.mxu0 %v172
    %204 = vmatprep.subr.mxu0 0.0
    %205 = vmatpush1.msra.mxu0 %v173
    %206 = vmatprep.subr.mxu0 0.0
    %207 = vmatpush1.msra.mxu0 %v174
    %208 = vmatprep.subr.mxu0 0.0
    %209 = vmatpush1.msra.mxu0 %v175
    %210 = vmatprep.subr.mxu0 0.0
    %211 = vmatpush1.msra.mxu0 %v176
    %212 = vmatprep.subr.mxu0 0.0
    %213 = vmatpush1.msra.mxu0 %v177
    %214 = vmatprep.subr.mxu0 0.0
    %215 = vmatpush1.msra.mxu0 %v178
    %216 = vmatprep.subr.mxu0 0.0
    %217 = vmatpush1.msra.mxu0 %v179
    %218 = vmatprep.subr.mxu0 0.0
    %219 = vmatpush1.msra.mxu0 %v180
    %220 = vmatprep.subr.mxu0 0.0
    %221 = vmatpush1.msra.mxu0 0.0
    %222 = vmatprep.subr.mxu0 0.0
    %223 = vmatpush1.msra.mxu0 0.0
    %224 = vmatprep.subr.mxu0 0.0
    %225 = vmatpush1.msra.mxu0 0.0
    %226 = vmatprep.subr.mxu0 0.0
    %227 = vmatpush1.msra.mxu0 0.0
    %228 = vmatprep.subr.mxu0 0.0
    %229 = vmatpush1.msra.mxu0 0.0
    %230 = vmatprep.subr.mxu0 0.0
    %231 = vmatpush1.msra.mxu0 0.0
    %232 = vmatprep.subr.mxu0 0.0
    %233 = vmatpush1.msra.mxu0 0.0
    %234 = vmatprep.subr.mxu0 0.0
    %235 = vmatpush1.msra.mxu0 0.0
    %236 = vmatprep.subr.mxu0 0.0
    %237 = vmatpush1.msra.mxu0 0.0
    %238 = vmatprep.subr.mxu0 0.0
    %239 = vmatpush1.msra.mxu0 0.0
    %240 = vmatprep.subr.mxu0 0.0
    %241 = vmatpush1.msra.mxu0 0.0
    %242 = vmatprep.subr.mxu0 0.0
    %243 = vmatpush1.msra.mxu0 0.0
    %244 = vmatprep.subr.mxu0 0.0
    %245 = vmatpush1.msra.mxu0 0.0
    %246 = vmatprep.subr.mxu0 0.0
    %247 = vmatpush1.msra.mxu0 0.0
    %248 = vmatprep.subr.mxu0 0.0
    %249 = vmatpush1.msra.mxu0 0.0
    %250 = vmatprep.subr.mxu0 0.0
    %251 = vmatpush1.msra.mxu0 0.0
    %252 = vmatprep.mubr.f32.mxu0 0.0
    %253 = vmatmul.mubr.f32.gmra.mrb[0].mxu0 %v164
    %v254 = vpop.f32.mrb[0].mxu0
    %v255 = vadd.f32 %v186, %v254
    %v256 = vpop.f32.mrb[0].mxu0
    %257 = vdwg.mxu0
    %vm258 = vcmp.gt.f32.partialorder %v255, 0.0
    %v259 = vmul.f32 %v255, 0.01
    %v260 = vsel %vm258, %v255, %v259
    %v261 = vld [vmem:[#allocation7] sm:$0xff]
    %v262 = vld [vmem:[#allocation7 + $0x8] sm:$0xff]
    %v263 = vld [vmem:[#allocation7 + $0x10] sm:$0xff]
    %v264 = vld [vmem:[#allocation7 + $0x18] sm:$0xff]
    %v265 = vld [vmem:[#allocation7 + $0x20] sm:$0xff]
    %v266 = vld [vmem:[#allocation7 + $0x28] sm:$0xff]
    %v267 = vld [vmem:[#allocation7 + $0x30] sm:$0xff]
    %v268 = vld [vmem:[#allocation7 + $0x38] sm:$0xff]
    %v269 = vld [vmem:[#allocation7 + $0x40] sm:$0xff]
    %v270 = vld [vmem:[#allocation7 + $0x48] sm:$0xff]
    %v271 = vld [vmem:[#allocation7 + $0x50] sm:$0xff]
    %v272 = vld [vmem:[#allocation7 + $0x58] sm:$0xff]
    %v273 = vld [vmem:[#allocation7 + $0x60] sm:$0xff]
    %v274 = vld [vmem:[#allocation7 + $0x68] sm:$0xff]
    %v275 = vld [vmem:[#allocation7 + $0x70] sm:$0xff]
    %v276 = vld [vmem:[#allocation7 + $0x78] sm:$0xff]
    %v277 = vld [vmem:[%s6] sm:$0x1]
    %v279 = vlaneseq
    %v280 = vshrl.u32 %v279, 7
    %v281 = vsub.s32 0, %v280
    %v282 = vrot.slane %v277, %v281
    %284 = vmatprep.subr.mxu0 0.0
    %285 = vmatpush1.msra.mxu0 %v261
    %286 = vmatprep.subr.mxu0 0.0
    %287 = vmatpush1.msra.mxu0 %v262
    %288 = vmatprep.subr.mxu0 0.0
    %289 = vmatpush1.msra.mxu0 %v263
    %290 = vmatprep.subr.mxu0 0.0
    %291 = vmatpush1.msra.mxu0 %v264
    %292 = vmatprep.subr.mxu0 0.0
    %293 = vmatpush1.msra.mxu0 %v265
    %294 = vmatprep.subr.mxu0 0.0
    %295 = vmatpush1.msra.mxu0 %v266
    %296 = vmatprep.subr.mxu0 0.0
    %297 = vmatpush1.msra.mxu0 %v267
    %298 = vmatprep.subr.mxu0 0.0
    %299 = vmatpush1.msra.mxu0 %v268
    %300 = vmatprep.subr.mxu0 0.0
    %301 = vmatpush1.msra.mxu0 %v269
    %302 = vmatprep.subr.mxu0 0.0
    %303 = vmatpush1.msra.mxu0 %v270
    %304 = vmatprep.subr.mxu0 0.0
    %305 = vmatpush1.msra.mxu0 %v271
    %306 = vmatprep.subr.mxu0 0.0
    %307 = vmatpush1.msra.mxu0 %v272
    %308 = vmatprep.subr.mxu0 0.0
    %309 = vmatpush1.msra.mxu0 %v273
    %310 = vmatprep.subr.mxu0 0.0
    %311 = vmatpush1.msra.mxu0 %v274
    %312 = vmatprep.subr.mxu0 0.0
    %313 = vmatpush1.msra.mxu0 %v275
    %314 = vmatprep.subr.mxu0 0.0
    %315 = vmatpush1.msra.mxu0 %v276
    %316 = vmatprep.subr.mxu0 0.0
    %317 = vmatpush1.msra.mxu0 0.0
    %318 = vmatprep.subr.mxu0 0.0
    %319 = vmatpush1.msra.mxu0 0.0
    %320 = vmatprep.subr.mxu0 0.0
    %321 = vmatpush1.msra.mxu0 0.0
    %322 = vmatprep.subr.mxu0 0.0
    %323 = vmatpush1.msra.mxu0 0.0
    %324 = vmatprep.subr.mxu0 0.0
    %325 = vmatpush1.msra.mxu0 0.0
    %326 = vmatprep.subr.mxu0 0.0
    %327 = vmatpush1.msra.mxu0 0.0
    %328 = vmatprep.subr.mxu0 0.0
    %329 = vmatpush1.msra.mxu0 0.0
    %330 = vmatprep.subr.mxu0 0.0
    %331 = vmatpush1.msra.mxu0 0.0
    %332 = vmatprep.subr.mxu0 0.0
    %333 = vmatpush1.msra.mxu0 0.0
    %334 = vmatprep.subr.mxu0 0.0
    %335 = vmatpush1.msra.mxu0 0.0
    %336 = vmatprep.subr.mxu0 0.0
    %337 = vmatpush1.msra.mxu0 0.0
    %338 = vmatprep.subr.mxu0 0.0
    %339 = vmatpush1.msra.mxu0 0.0
    %340 = vmatprep.subr.mxu0 0.0
    %341 = vmatpush1.msra.mxu0 0.0
    %342 = vmatprep.subr.mxu0 0.0
    %343 = vmatpush1.msra.mxu0 0.0
    %344 = vmatprep.subr.mxu0 0.0
    %345 = vmatpush1.msra.mxu0 0.0
    %346 = vmatprep.subr.mxu0 0.0
    %347 = vmatpush1.msra.mxu0 0.0
    %348 = vmatprep.mubr.f32.mxu0 0.0
    %349 = vmatmul.mubr.f32.gmra.mrb[0].mxu0 %v260
    %v350 = vpop.f32.mrb[0].mxu0
    %v351 = vadd.f32 %v282, %v350
    %v352 = vpop.f32.mrb[0].mxu0
    %353 = vdwg.mxu0
    %vm354 = vcmp.gt.f32.partialorder %v351, 0.0
    %v355 = vmul.f32 %v351, 0.01
    %v356 = vsel %vm354, %v351, %v355
    %v357 = vmul.f32 %v356, %v356
    %358 = vadd.xlane.f32.xlu0 %v357
    %v359 = vpop.xlane.xlu0 %358
    %v360 = vrsqrt.pop %v359
    %v361 = vmul.f32 %v359, %v360
    %vm362 = vcmp.eq.f32.partialorder %v359, inf
    %v363 = vsel %vm362, %v359, %v361
    %vm364 = vcmp.eq.f32.partialorder %v359, 0.0
    %v365 = vand.u32 %v359, 2147483648
    %v366 = vsel %vm364, %v365, %v363
    %v367 = vadd.f32 %v366, 1e-08
    %v368 = vrcp.pop %v367
    %v369 = vmul.f32 %v356, %v368
    %370 = vst [vmem:[#allocation8] sm:$0xff] %v369
    // Predicated region
    $region42: #{visual_encoder.1} parent=1 // pred_check
      _
    $region43: #{visual_encoder.1} parent=1 // pred_check_branch
      %372 = sbr.rel (0) target = $region45
    $region44: #{visual_encoder.1} parent=1 // pred_region
      %s374 = ssub.s32 128, 128
      %375 = vsyncadd [#allocation4], %s374
      %s377 = sshll.u32 [#allocation8], 4
      %s378 = int_to_ptr.vmem [resolvable:$true] %s377
      %380 = dma.vmem_to_hbm [thread:$0]  %s378, 128, %s7, [#allocation4]
    $region45: #{visual_encoder.1} parent=1 // pred_fallthru
      _
    // Predicated region
    $region46: #{visual_encoder.1} parent=1 // pred_check
      _
    $region47: #{visual_encoder.1} parent=1 // pred_check_branch
      %382 = sbr.rel (0) target = $region49
    $region48: #{visual_encoder.1} parent=1 // pred_region
      %383 = dma.done [#allocation4], 128
    $region49: #{visual_encoder.1} parent=1 // pred_fallthru
      _
    %384 = vsyncpa [#allocation3], 1
    %385 = vsyncpa [#allocation6], 1
    %386 = vsyncpa [#allocation4], 1

</llo_original>
